<compile_context>
chip_gen: v7x
topology: tpu7x:2x2x1
jax: 0.10.0
libtpu: 0.0.40
codegen_flags: <defaults>
</compile_context>

<pallas_src>
import functools

import jax
import jax.numpy as jnp
from jax.experimental import pallas as pl
from jax.experimental.pallas import tpu as pltpu

IN_DIM = 29
K_PAD = 32          # layer-1 contraction padded to a multiple of 8
H1 = 64
H2 = 128
OUT_DIM = 1


def _mlp_kernel(x_ref, w1_ref, b1_ref, w2_ref, b2_ref, w3_ref, b3_ref, o_ref):
    # x_ref : (TB, 32)  bf16      w1: (32, 64) bf16   b1: (1, 64)  f32
    # w2    : (64, 128) bf16      b2: (1, 128) f32
    # w3    : (1, 128)  f32       b3: (1, 1)   f32
    # o_ref : (1, 1, TB) f32      (lane-dense: batch rows along the lane axis)
    x = x_ref[...]                                                     # bf16

    # ---- layer 1 (MXU, bf16 in / f32 acc) + relu ------------------------------
    h1 = jnp.dot(x, w1_ref[...], preferred_element_type=jnp.float32)
    h1 = jnp.maximum(h1 + b1_ref[...], 0.0)
    # dropout1: identity in eval mode
    h1 = h1.astype(jnp.bfloat16)

    # ---- layer 2 (MXU, bf16 in / f32 acc) + relu ------------------------------
    h2 = jnp.dot(h1, w2_ref[...], preferred_element_type=jnp.float32)
    h2 = jnp.maximum(h2 + b2_ref[...], 0.0)                            # (TB, 128) f32
    # dropout2: identity in eval mode

    # ---- output layer: N=1 matmul replaced by VPU multiply + XLU reduce -------
    prod = h2 * w3_ref[...]                                            # (TB, 128) VPU
    prod_t = jnp.transpose(prod)                                       # (128, TB) XLU
    logits = jnp.sum(prod_t, axis=0, keepdims=True) + b3_ref[...]      # (1, TB)

    # ---- sigmoid: exp and approx reciprocal both land on the EUP --------------
    probs = pl.reciprocal(1.0 + jnp.exp(-logits), approx=True)         # (1, TB)
    o_ref[...] = probs.reshape(o_ref.shape).astype(o_ref.dtype)


@functools.partial(jax.jit, static_argnames=("block_batch",))
def fraud_nn_forward(x, params, *, block_batch=1024):
    """Forward pass. x: (B, 29) float32 -> (B, 1) float32 probabilities."""
    w1, b1, w2, b2, w3, b3 = params
    B, feat = x.shape
    assert feat == IN_DIM

    # Pad features 29 -> 32 (zero columns) and batch to a multiple of the tile.
    x = jnp.pad(x, ((0, 0), (0, K_PAD - IN_DIM)))
    pad = (-B) % block_batch
    if pad:
        x = jnp.pad(x, ((0, pad), (0, 0)))
    Bp = B + pad
    num_tiles = Bp // block_batch

    # bf16 inputs for the MXU; biases / final row stay f32 (added post-accumulate).
    x_bf = x.astype(jnp.bfloat16)
    w1_bf = jnp.pad(w1, ((0, K_PAD - IN_DIM), (0, 0))).astype(jnp.bfloat16)
    w2_bf = w2.astype(jnp.bfloat16)
    w3_row = w3.reshape(1, H2).astype(jnp.float32)                     # (1, 128)

    out = pl.pallas_call(
        _mlp_kernel,
        out_shape=jax.ShapeDtypeStruct((num_tiles, 1, block_batch), jnp.float32),
        grid_spec=pltpu.PrefetchScalarGridSpec(
            num_scalar_prefetch=0,
            grid=(num_tiles,),
            in_specs=[
                pl.BlockSpec((block_batch, K_PAD), lambda i: (i, 0)),   # x tile
                pl.BlockSpec((K_PAD, H1), lambda i: (0, 0)),            # w1
                pl.BlockSpec((1, H1), lambda i: (0, 0)),                # b1
                pl.BlockSpec((H1, H2), lambda i: (0, 0)),               # w2
                pl.BlockSpec((1, H2), lambda i: (0, 0)),                # b2
                pl.BlockSpec((1, H2), lambda i: (0, 0)),                # w3 (row)
                pl.BlockSpec((1, OUT_DIM), lambda i: (0, 0)),           # b3
            ],
            # Lane-dense output block: batch rows of this tile live on the lane axis.
            out_specs=pl.BlockSpec((1, 1, block_batch), lambda i: (i, 0, 0)),
        ),
        compiler_params=pltpu.CompilerParams(
            dimension_semantics=("parallel",)),
    )(x_bf, w1_bf, b1, w2_bf, b2, w3_row, b3)

    # (num_tiles, 1, block_batch) row-major -> (Bp,) in batch order -> (B, 1)
    return out.reshape(-1)[:B].reshape(B, OUT_DIM)


def init_params(key):
    """Deterministic init mimicking PyTorch's U(-1/sqrt(fan_in), 1/sqrt(fan_in))."""
    ks = jax.random.split(key, 6)

    def uni(k, shape, fan_in):
        bound = 1.0 / jnp.sqrt(jnp.float32(fan_in))
        return jax.random.uniform(k, shape, jnp.float32, -bound, bound)

    w1 = uni(ks[0], (IN_DIM, H1), IN_DIM)
    b1 = uni(ks[1], (1, H1), IN_DIM)
    w2 = uni(ks[2], (H1, H2), H1)
    b2 = uni(ks[3], (1, H2), H1)
    w3 = uni(ks[4], (H2, OUT_DIM), H2)
    b3 = uni(ks[5], (1, OUT_DIM), H2)
    return (w1, b1, w2, b2, w3, b3)


def reference_forward(x, params):
    """Pure-JAX fp32 reference (eval-mode: dropout = identity)."""
    w1, b1, w2, b2, w3, b3 = params
    h1 = jnp.maximum(x @ w1 + b1, 0.0)
    h2 = jnp.maximum(h1 @ w2 + b2, 0.0)
    return jax.nn.sigmoid(h2 @ w3 + b3)


if __name__ == "__main__":
    key = jax.random.PRNGKey(0)
    k_x, k_p = jax.random.split(key)
    params = init_params(k_p)

    # (batch, block_batch) cases: tiny batch (pads up, grid=1) and a batch that
    # exercises padding + a multi-step grid (grid=2 -> both v7x TensorCores).
    for batch, tb in ((8, 256), (2000, 1024)):
        x = jax.random.normal(jax.random.fold_in(k_x, batch), (batch, IN_DIM), jnp.float32)
        out = jax.block_until_ready(fraud_nn_forward(x, params, block_batch=tb))
        ref = reference_forward(x, params)
        assert out.shape == (batch, OUT_DIM)
        # bf16 MXU inputs + approx reciprocal -> loosened tolerance vs fp32 reference.
        assert jnp.allclose(out, ref, atol=2e-2), (
            f"mismatch vs JAX reference at batch={batch}: "
            f"max |diff| = {float(jnp.max(jnp.abs(out - ref)))}")

    print("KERNEL_OK")
</pallas_src>

<mosaic_0001>
module attributes {stable_mosaic.version = 11 : i64} {
  func.func @_mlp_kernel(%arg0: i32, %arg1: memref<256x32xbf16, #tpu.memory_space<vmem>>, %arg2: memref<32x64xbf16, #tpu.memory_space<vmem>>, %arg3: memref<1x64xf32, #tpu.memory_space<vmem>>, %arg4: memref<64x128xbf16, #tpu.memory_space<vmem>>, %arg5: memref<1x128xf32, #tpu.memory_space<vmem>>, %arg6: memref<1x128xf32, #tpu.memory_space<vmem>>, %arg7: memref<1x1xf32, #tpu.memory_space<vmem>>, %arg8: memref<1x1x256xf32, #tpu.memory_space<vmem>>) attributes {dimension_semantics = [#tpu.dimension_semantics<parallel>], iteration_bounds = array<i64: 1>, scalar_prefetch = 0 : i64, scratch_operands = 0 : i64, tpu.core_type = #tpu.core_type<tc>, window_params = [{transform_indices = @transform_0, window_bounds = array<i64: 256, 32>}, {pipeline_mode = #tpu.pipeline_mode<synchronous>, transform_indices = @transform_1, window_bounds = array<i64: 32, 64>}, {pipeline_mode = #tpu.pipeline_mode<synchronous>, transform_indices = @transform_2, window_bounds = array<i64: 1, 64>}, {pipeline_mode = #tpu.pipeline_mode<synchronous>, transform_indices = @transform_3, window_bounds = array<i64: 64, 128>}, {pipeline_mode = #tpu.pipeline_mode<synchronous>, transform_indices = @transform_4, window_bounds = array<i64: 1, 128>}, {pipeline_mode = #tpu.pipeline_mode<synchronous>, transform_indices = @transform_5, window_bounds = array<i64: 1, 128>}, {pipeline_mode = #tpu.pipeline_mode<synchronous>, transform_indices = @transform_6, window_bounds = array<i64: 1, 1>}, {transform_indices = @transform_7, window_bounds = array<i64: 1, 1, 256>}]} {
    %c0 = arith.constant 0 : index
    %c0_0 = arith.constant 0 : index
    %0 = vector.load %arg1[%c0, %c0_0] : memref<256x32xbf16, #tpu.memory_space<vmem>>, vector<256x32xbf16>
    %c0_1 = arith.constant 0 : index
    %c0_2 = arith.constant 0 : index
    %1 = vector.load %arg2[%c0_1, %c0_2] : memref<32x64xbf16, #tpu.memory_space<vmem>>, vector<32x64xbf16>
    %cst = arith.constant dense<0.000000e+00> : vector<256x64xf32>
    %2 = tpu.matmul %0, %1, %cst {dimension_numbers = #tpu.dot_dimension_numbers<[1], [0], [0], [1], [0, 0, 1, 1], [], []>} : vector<256x32xbf16>, vector<32x64xbf16>, vector<256x64xf32> -> vector<256x64xf32>
    %c0_3 = arith.constant 0 : index
    %c0_4 = arith.constant 0 : index
    %3 = vector.load %arg3[%c0_3, %c0_4] : memref<1x64xf32, #tpu.memory_space<vmem>>, vector<1x64xf32>
    %4 = vector.broadcast %3 : vector<1x64xf32> to vector<256x64xf32>
    %5 = arith.addf %2, %4 : vector<256x64xf32>
    %cst_5 = arith.constant 0.000000e+00 : f32
    %6 = vector.broadcast %cst_5 : f32 to vector<256x64xf32>
    %7 = arith.maximumf %5, %6 : vector<256x64xf32>
    %8 = arith.truncf %7 : vector<256x64xf32> to vector<256x64xbf16>
    %c0_6 = arith.constant 0 : index
    %c0_7 = arith.constant 0 : index
    %9 = vector.load %arg4[%c0_6, %c0_7] : memref<64x128xbf16, #tpu.memory_space<vmem>>, vector<64x128xbf16>
    %cst_8 = arith.constant dense<0.000000e+00> : vector<256x128xf32>
    %10 = tpu.matmul %8, %9, %cst_8 {dimension_numbers = #tpu.dot_dimension_numbers<[1], [0], [0], [1], [0, 0, 1, 1], [], []>} : vector<256x64xbf16>, vector<64x128xbf16>, vector<256x128xf32> -> vector<256x128xf32>
    %c0_9 = arith.constant 0 : index
    %c0_10 = arith.constant 0 : index
    %11 = vector.load %arg5[%c0_9, %c0_10] : memref<1x128xf32, #tpu.memory_space<vmem>>, vector<1x128xf32>
    %12 = vector.broadcast %11 : vector<1x128xf32> to vector<256x128xf32>
    %13 = arith.addf %10, %12 : vector<256x128xf32>
    %cst_11 = arith.constant 0.000000e+00 : f32
    %14 = vector.broadcast %cst_11 : f32 to vector<256x128xf32>
    %15 = arith.maximumf %13, %14 : vector<256x128xf32>
    %c0_12 = arith.constant 0 : index
    %c0_13 = arith.constant 0 : index
    %16 = vector.load %arg6[%c0_12, %c0_13] : memref<1x128xf32, #tpu.memory_space<vmem>>, vector<1x128xf32>
    %17 = vector.broadcast %16 : vector<1x128xf32> to vector<256x128xf32>
    %18 = arith.mulf %15, %17 : vector<256x128xf32>
    %19 = tpu.transpose %18, [1, 0] : vector<256x128xf32> -> vector<128x256xf32>
    %cst_14 = arith.constant dense<0.000000e+00> : vector<256xf32>
    %20 = vector.multi_reduction <add>, %19, %cst_14 [0] : vector<128x256xf32> to vector<256xf32>
    %21 = vector.shape_cast %20 : vector<256xf32> to vector<1x256xf32>
    %c0_15 = arith.constant 0 : index
    %c0_16 = arith.constant 0 : index
    %22 = vector.load %arg7[%c0_15, %c0_16] : memref<1x1xf32, #tpu.memory_space<vmem>>, vector<1x1xf32>
    %23 = vector.broadcast %22 : vector<1x1xf32> to vector<1x256xf32>
    %24 = arith.addf %21, %23 : vector<1x256xf32>
    %cst_17 = arith.constant 0.000000e+00 : f32
    %25 = vector.broadcast %cst_17 : f32 to vector<1x256xf32>
    %26 = arith.subf %25, %24 : vector<1x256xf32>
    %27 = math.exp %26 : vector<1x256xf32>
    %cst_18 = arith.constant 1.000000e+00 : f32
    %28 = vector.broadcast %cst_18 : f32 to vector<1x256xf32>
    %29 = arith.addf %28, %27 : vector<1x256xf32>
    %30 = tpu.reciprocal %29 {approx = true} : vector<1x256xf32> -> vector<1x256xf32>
    %31 = vector.shape_cast %30 : vector<1x256xf32> to vector<1x1x256xf32>
    %c0_19 = arith.constant 0 : index
    %c0_20 = arith.constant 0 : index
    %c0_21 = arith.constant 0 : index
    %32 = vector.load %arg8[%c0_19, %c0_20, %c0_21] : memref<1x1x256xf32, #tpu.memory_space<vmem>>, vector<1x1x256xf32>
    tpu.vector_store %arg8[%c0_19, %c0_20, %c0_21], %31 {strides = array<i32>} : memref<1x1x256xf32, #tpu.memory_space<vmem>>, vector<1x1x256xf32>,
    return
  }
  func.func @transform_0(%arg0: i32) -> (i32, i32) {
    %c0_i32 = arith.constant 0 : i32
    %c0_i32_0 = arith.constant 0 : i32
    return %arg0, %c0_i32 : i32, i32
  }
  func.func @transform_1(%arg0: i32) -> (i32, i32) {
    %c0_i32 = arith.constant 0 : i32
    %c0_i32_0 = arith.constant 0 : i32
    %c0_i32_1 = arith.constant 0 : i32
    return %c0_i32, %c0_i32_0 : i32, i32
  }
  func.func @transform_2(%arg0: i32) -> (i32, i32) {
    %c0_i32 = arith.constant 0 : i32
    %c0_i32_0 = arith.constant 0 : i32
    %c0_i32_1 = arith.constant 0 : i32
    return %c0_i32, %c0_i32_0 : i32, i32
  }
  func.func @transform_3(%arg0: i32) -> (i32, i32) {
    %c0_i32 = arith.constant 0 : i32
    %c0_i32_0 = arith.constant 0 : i32
    %c0_i32_1 = arith.constant 0 : i32
    return %c0_i32, %c0_i32_0 : i32, i32
  }
  func.func @transform_4(%arg0: i32) -> (i32, i32) {
    %c0_i32 = arith.constant 0 : i32
    %c0_i32_0 = arith.constant 0 : i32
    %c0_i32_1 = arith.constant 0 : i32
    return %c0_i32, %c0_i32_0 : i32, i32
  }
  func.func @transform_5(%arg0: i32) -> (i32, i32) {
    %c0_i32 = arith.constant 0 : i32
    %c0_i32_0 = arith.constant 0 : i32
    %c0_i32_1 = arith.constant 0 : i32
    return %c0_i32, %c0_i32_0 : i32, i32
  }
  func.func @transform_6(%arg0: i32) -> (i32, i32) {
    %c0_i32 = arith.constant 0 : i32
    %c0_i32_0 = arith.constant 0 : i32
    %c0_i32_1 = arith.constant 0 : i32
    return %c0_i32, %c0_i32_0 : i32, i32
  }
  func.func @transform_7(%arg0: i32) -> (i32, i32, i32) {
    %c0_i32 = arith.constant 0 : i32
    %c0_i32_0 = arith.constant 0 : i32
    %c0_i32_1 = arith.constant 0 : i32
    return %arg0, %c0_i32, %c0_i32_0 : i32, i32, i32
  }
}

</mosaic_0001>

<llo_original>
// kernel: fraud_nn_forward.1
$region0: #{fraud_nn_forward.1}
  #allocation0 [shape = 'u32[]', space=smem, size = 0x4, offset = 0x4, fixed_abs, tag = 'smem constant byte address 0x4 - core index']
  #allocation1 [shape = 'u32[144,128]{1,0:T(1,128)}', space=vmem, size = 0x12000, scoped, tag = 'internal scratch']
  #allocation2 [shape = 'f32[1,1]{1,0:T(1,128)S(1)}', space=vmem, size = 0x200, scoped, tag = 'scoped memory for fraud_nn_forward.1']
  %s0 = inlined_call_operand.vmem [shape: bf16[256,32], index: 0, kind: input, shape index: {}]
  %s1 = inlined_call_operand.vmem [shape: bf16[32,64], index: 1, kind: input, shape index: {}]
  %s2 = inlined_call_operand.vmem [shape: f32[1,64], index: 2, kind: input, shape index: {}]
  %s3 = inlined_call_operand.vmem [shape: bf16[64,128], index: 3, kind: input, shape index: {}]
  %s4 = inlined_call_operand.vmem [shape: f32[1,128], index: 4, kind: input, shape index: {}]
  %s5 = inlined_call_operand.vmem [shape: f32[1,128], index: 5, kind: input, shape index: {}]
  %s6 = inlined_call_operand.<no memory space> [shape: f32[1,1], index: 6, kind: input, shape index: {}]
  %s7 = inlined_call_operand.vmem [shape: f32[1,1,256], index: 7, kind: output, shape index: {}]
  %s8 = sld [smem:[#allocation0]]
  $region38: #{fraud_nn_forward.1} parent=0
    _
  %s10 = ssub.s32 1, %s8
  %s11 = scalar_select 0, %s10, %s8
  %v12 = vstv %s6
  %13 = vst [vmem:[#allocation2] sm:$0x1] %v12
  // Predicated region
  $region2: #{fraud_nn_forward.1} parent=0 // pred_check
    _
  $region3: #{fraud_nn_forward.1} parent=0 // pred_check_branch
    %15 = sbr.rel (0) target = $region5
  $region4: #{fraud_nn_forward.1} parent=0 // pred_region
    _
  $region5: #{fraud_nn_forward.1} parent=0 // pred_fallthru
    _
  // Predicated region
  $region6: #{fraud_nn_forward.1} parent=0 // pred_check
    _
  $region7: #{fraud_nn_forward.1} parent=0 // pred_check_branch
    %17 = sbr.rel (0) target = $region9
  $region8: #{fraud_nn_forward.1} parent=0 // pred_region
    _
  $region9: #{fraud_nn_forward.1} parent=0 // pred_fallthru
    _
  // Predicated region
  $region10: #{fraud_nn_forward.1} parent=0 // pred_check
    _
  $region11: #{fraud_nn_forward.1} parent=0 // pred_check_branch
    %19 = sbr.rel (0) target = $region13
  $region12: #{fraud_nn_forward.1} parent=0 // pred_region
    _
  $region13: #{fraud_nn_forward.1} parent=0 // pred_fallthru
    _
  // Predicated region
  $region14: #{fraud_nn_forward.1} parent=0 // pred_check
    _
  $region15: #{fraud_nn_forward.1} parent=0 // pred_check_branch
    %21 = sbr.rel (0) target = $region17
  $region16: #{fraud_nn_forward.1} parent=0 // pred_region
    _
  $region17: #{fraud_nn_forward.1} parent=0 // pred_fallthru
    _
  // Predicated region
  $region18: #{fraud_nn_forward.1} parent=0 // pred_check
    _
  $region19: #{fraud_nn_forward.1} parent=0 // pred_check_branch
    %23 = sbr.rel (0) target = $region21
  $region20: #{fraud_nn_forward.1} parent=0 // pred_region
    _
  $region21: #{fraud_nn_forward.1} parent=0 // pred_fallthru
    _
  // Predicated region
  $region22: #{fraud_nn_forward.1} parent=0 // pred_check
    _
  $region23: #{fraud_nn_forward.1} parent=0 // pred_check_branch
    %25 = sbr.rel (0) target = $region25
  $region24: #{fraud_nn_forward.1} parent=0 // pred_region
    _
  $region25: #{fraud_nn_forward.1} parent=0 // pred_fallthru
    _
  // Predicated region
  $region26: #{fraud_nn_forward.1} parent=0 // pred_check
    _
  $region27: #{fraud_nn_forward.1} parent=0 // pred_check_branch
    %27 = sbr.rel (0) target = $region29
  $region28: #{fraud_nn_forward.1} parent=0 // pred_region
    _
  $region29: #{fraud_nn_forward.1} parent=0 // pred_fallthru
    _
  %v29 = vld [vmem:[%s0] sm:$0xf]
  %v30 = vld [vmem:[%s0 + $0x4] sm:$0xf]
  %v31 = vld [vmem:[%s0 + $0x8] sm:$0xf]
  %v32 = vld [vmem:[%s0 + $0xc] sm:$0xf]
  %v33 = vld [vmem:[%s0 + $0x10] sm:$0xf]
  %v34 = vld [vmem:[%s0 + $0x14] sm:$0xf]
  %v35 = vld [vmem:[%s0 + $0x18] sm:$0xf]
  %v36 = vld [vmem:[%s0 + $0x1c] sm:$0xf]
  %v37 = vld [vmem:[%s0 + $0x20] sm:$0xf]
  %v38 = vld [vmem:[%s0 + $0x24] sm:$0xf]
  %v39 = vld [vmem:[%s0 + $0x28] sm:$0xf]
  %v40 = vld [vmem:[%s0 + $0x2c] sm:$0xf]
  %v41 = vld [vmem:[%s0 + $0x30] sm:$0xf]
  %v42 = vld [vmem:[%s0 + $0x34] sm:$0xf]
  %v43 = vld [vmem:[%s0 + $0x38] sm:$0xf]
  %v44 = vld [vmem:[%s0 + $0x3c] sm:$0xf]
  %v45 = vld [vmem:[%s0 + $0x40] sm:$0xf]
  %v46 = vld [vmem:[%s0 + $0x44] sm:$0xf]
  %v47 = vld [vmem:[%s0 + $0x48] sm:$0xf]
  %v48 = vld [vmem:[%s0 + $0x4c] sm:$0xf]
  %v49 = vld [vmem:[%s0 + $0x50] sm:$0xf]
  %v50 = vld [vmem:[%s0 + $0x54] sm:$0xf]
  %v51 = vld [vmem:[%s0 + $0x58] sm:$0xf]
  %v52 = vld [vmem:[%s0 + $0x5c] sm:$0xf]
  %v53 = vld [vmem:[%s0 + $0x60] sm:$0xf]
  %v54 = vld [vmem:[%s0 + $0x64] sm:$0xf]
  %v55 = vld [vmem:[%s0 + $0x68] sm:$0xf]
  %v56 = vld [vmem:[%s0 + $0x6c] sm:$0xf]
  %v57 = vld [vmem:[%s0 + $0x70] sm:$0xf]
  %v58 = vld [vmem:[%s0 + $0x74] sm:$0xf]
  %v59 = vld [vmem:[%s0 + $0x78] sm:$0xf]
  %v60 = vld [vmem:[%s0 + $0x7c] sm:$0xf]
  %v61 = vld [vmem:[%s1] sm:$0xf]
  %v62 = vld [vmem:[%s1 + $0x4] sm:$0xf]
  %v63 = vld [vmem:[%s1 + $0x8] sm:$0xf]
  %v64 = vld [vmem:[%s1 + $0xc] sm:$0xf]
  %v65 = vld [vmem:[%s2] sm:$0x1]
  %v67 = vlaneseq
  %v68 = vshrl.u32 %v67, 7
  %v69 = vsub.s32 0, %v68
  %v70 = vrot.slane %v65, %v69
  %v104 = vunpack.c.l.b16 %v29
  %v105 = vunpack.c.l.b16 %v30
  %v106 = vunpack.c.l.b16 %v31
  %v107 = vunpack.c.l.b16 %v32
  %v108 = vunpack.c.l.b16 %v33
  %v109 = vunpack.c.l.b16 %v34
  %v110 = vunpack.c.l.b16 %v35
  %v111 = vunpack.c.l.b16 %v36
  %v112 = vunpack.c.l.b16 %v37
  %v113 = vunpack.c.l.b16 %v38
  %v114 = vunpack.c.l.b16 %v39
  %v115 = vunpack.c.l.b16 %v40
  %v116 = vunpack.c.l.b16 %v41
  %v117 = vunpack.c.l.b16 %v42
  %v118 = vunpack.c.l.b16 %v43
  %v119 = vunpack.c.l.b16 %v44
  %v120 = vunpack.c.l.b16 %v45
  %v121 = vunpack.c.l.b16 %v46
  %v122 = vunpack.c.l.b16 %v47
  %v123 = vunpack.c.l.b16 %v48
  %v124 = vunpack.c.l.b16 %v49
  %v125 = vunpack.c.l.b16 %v50
  %v126 = vunpack.c.l.b16 %v51
  %v127 = vunpack.c.l.b16 %v52
  %v128 = vunpack.c.l.b16 %v53
  %v129 = vunpack.c.l.b16 %v54
  %v130 = vunpack.c.l.b16 %v55
  %v131 = vunpack.c.l.b16 %v56
  %v132 = vunpack.c.l.b16 %v57
  %v133 = vunpack.c.l.b16 %v58
  %v134 = vunpack.c.l.b16 %v59
  %v135 = vunpack.c.l.b16 %v60
  %v136 = vpack.c.b16 %v105, %v104
  %v137 = vpack.c.b16 %v107, %v106
  %v138 = vpack.c.b16 %v109, %v108
  %v139 = vpack.c.b16 %v111, %v110
  %v140 = vpack.c.b16 %v113, %v112
  %v141 = vpack.c.b16 %v115, %v114
  %v142 = vpack.c.b16 %v117, %v116
  %v143 = vpack.c.b16 %v119, %v118
  %v144 = vpack.c.b16 %v121, %v120
  %v145 = vpack.c.b16 %v123, %v122
  %v146 = vpack.c.b16 %v125, %v124
  %v147 = vpack.c.b16 %v127, %v126
  %v148 = vpack.c.b16 %v129, %v128
  %v149 = vpack.c.b16 %v131, %v130
  %v150 = vpack.c.b16 %v133, %v132
  %v151 = vpack.c.b16 %v135, %v134
  %v156 = vunpack.c.l.b16 %v61
  %v157 = vunpack.c.l.b16 %v62
  %v158 = vunpack.c.l.b16 %v63
  %v159 = vunpack.c.l.b16 %v64
  %v160 = vpack.c.b16 %v157, %v156
  %v161 = vpack.c.b16 %v159, %v158
  %vm164 = vcmask 261120
  %v166 = vsel %vm164, %v136, 0
  %v169 = vsel %vm164, %v137, 0
  %v172 = vsel %vm164, %v138, 0
  %v175 = vsel %vm164, %v139, 0
  %v178 = vsel %vm164, %v140, 0
  %v181 = vsel %vm164, %v141, 0
  %v184 = vsel %vm164, %v142, 0
  %v187 = vsel %vm164, %v143, 0
  %v190 = vsel %vm164, %v144, 0
  %v193 = vsel %vm164, %v145, 0
  %v196 = vsel %vm164, %v146, 0
  %v199 = vsel %vm164, %v147, 0
  %v202 = vsel %vm164, %v148, 0
  %v205 = vsel %vm164, %v149, 0
  %v208 = vsel %vm164, %v150, 0
  %v211 = vsel %vm164, %v151, 0
  %213 = vmatprep.subr.bf16.mxu0 0
  %214 = vmatpush1.bf16.msra.mxu0 %v160
  %215 = vmatprep.subr.bf16.mxu0 0
  %216 = vmatpush1.bf16.msra.mxu0 %v161
  %217 = vmatprep.subr.bf16.mxu0 0
  %218 = vmatpush1.bf16.msra.mxu0 0
  %219 = vmatprep.subr.bf16.mxu0 0
  %220 = vmatpush1.bf16.msra.mxu0 0
  %221 = vmatprep.subr.bf16.mxu0 0
  %222 = vmatpush1.bf16.msra.mxu0 0
  %223 = vmatprep.subr.bf16.mxu0 0
  %224 = vmatpush1.bf16.msra.mxu0 0
  %225 = vmatprep.subr.bf16.mxu0 0
  %226 = vmatpush1.bf16.msra.mxu0 0
  %227 = vmatprep.subr.bf16.mxu0 0
  %228 = vmatpush1.bf16.msra.mxu0 0
  %229 = vmatprep.subr.bf16.mxu0 0
  %230 = vmatpush1.bf16.msra.mxu0 0
  %231 = vmatprep.subr.bf16.mxu0 0
  %232 = vmatpush1.bf16.msra.mxu0 0
  %233 = vmatprep.subr.bf16.mxu0 0
  %234 = vmatpush1.bf16.msra.mxu0 0
  %235 = vmatprep.subr.bf16.mxu0 0
  %236 = vmatpush1.bf16.msra.mxu0 0
  %237 = vmatprep.subr.bf16.mxu0 0
  %238 = vmatpush1.bf16.msra.mxu0 0
  %239 = vmatprep.subr.bf16.mxu0 0
  %240 = vmatpush1.bf16.msra.mxu0 0
  %241 = vmatprep.subr.bf16.mxu0 0
  %242 = vmatpush1.bf16.msra.mxu0 0
  %243 = vmatprep.subr.bf16.mxu0 0
  %244 = vmatpush1.bf16.msra.mxu0 0
  %245 = vmatprep.mubr.bf16.mxu0 0
  %246 = vmatmul.mubr.bf16.gmra.mrb[0].mxu0 %v166
  %v247 = vpop.f32.mrb[0].mxu0
  %v248 = vadd.f32 %v70, %v247
  %v249 = vpop.f32.mrb[0].mxu0
  %v250 = vpop.f32.mrb[0].mxu0
  %v251 = vadd.f32 %v70, %v250
  %v252 = vpop.f32.mrb[0].mxu0
  %253 = vmatprep.mubr.bf16.mxu0 0
  %254 = vmatmul.mubr.bf16.gmra.mrb[0].mxu0 %v169
  %v255 = vpop.f32.mrb[0].mxu0
  %v256 = vadd.f32 %v70, %v255
  %v257 = vpop.f32.mrb[0].mxu0
  %v258 = vpop.f32.mrb[0].mxu0
  %v259 = vadd.f32 %v70, %v258
  %v260 = vpop.f32.mrb[0].mxu0
  %261 = vmatprep.mubr.bf16.mxu0 0
  %262 = vmatmul.mubr.bf16.gmra.mrb[0].mxu0 %v172
  %v263 = vpop.f32.mrb[0].mxu0
  %v264 = vadd.f32 %v70, %v263
  %v265 = vpop.f32.mrb[0].mxu0
  %v266 = vpop.f32.mrb[0].mxu0
  %v267 = vadd.f32 %v70, %v266
  %v268 = vpop.f32.mrb[0].mxu0
  %269 = vmatprep.mubr.bf16.mxu0 0
  %270 = vmatmul.mubr.bf16.gmra.mrb[0].mxu0 %v175
  %v271 = vpop.f32.mrb[0].mxu0
  %v272 = vadd.f32 %v70, %v271
  %v273 = vpop.f32.mrb[0].mxu0
  %v274 = vpop.f32.mrb[0].mxu0
  %v275 = vadd.f32 %v70, %v274
  %v276 = vpop.f32.mrb[0].mxu0
  %277 = vmatprep.mubr.bf16.mxu0 0
  %278 = vmatmul.mubr.bf16.gmra.mrb[0].mxu0 %v178
  %v279 = vpop.f32.mrb[0].mxu0
  %v280 = vadd.f32 %v70, %v279
  %v281 = vpop.f32.mrb[0].mxu0
  %v282 = vpop.f32.mrb[0].mxu0
  %v283 = vadd.f32 %v70, %v282
  %v284 = vpop.f32.mrb[0].mxu0
  %285 = vmatprep.mubr.bf16.mxu0 0
  %286 = vmatmul.mubr.bf16.gmra.mrb[0].mxu0 %v181
  %v287 = vpop.f32.mrb[0].mxu0
  %v288 = vadd.f32 %v70, %v287
  %v289 = vpop.f32.mrb[0].mxu0
  %v290 = vpop.f32.mrb[0].mxu0
  %v291 = vadd.f32 %v70, %v290
  %v292 = vpop.f32.mrb[0].mxu0
  %293 = vmatprep.mubr.bf16.mxu0 0
  %294 = vmatmul.mubr.bf16.gmra.mrb[0].mxu0 %v184
  %v295 = vpop.f32.mrb[0].mxu0
  %v296 = vadd.f32 %v70, %v295
  %v297 = vpop.f32.mrb[0].mxu0
  %v298 = vpop.f32.mrb[0].mxu0
  %v299 = vadd.f32 %v70, %v298
  %v300 = vpop.f32.mrb[0].mxu0
  %301 = vmatprep.mubr.bf16.mxu0 0
  %302 = vmatmul.mubr.bf16.gmra.mrb[0].mxu0 %v187
  %v303 = vpop.f32.mrb[0].mxu0
  %v304 = vadd.f32 %v70, %v303
  %v305 = vpop.f32.mrb[0].mxu0
  %v306 = vpop.f32.mrb[0].mxu0
  %v307 = vadd.f32 %v70, %v306
  %v308 = vpop.f32.mrb[0].mxu0
  %309 = vmatprep.mubr.bf16.mxu0 0
  %310 = vmatmul.mubr.bf16.gmra.mrb[0].mxu0 %v190
  %v311 = vpop.f32.mrb[0].mxu0
  %v312 = vadd.f32 %v70, %v311
  %v313 = vpop.f32.mrb[0].mxu0
  %v314 = vpop.f32.mrb[0].mxu0
  %v315 = vadd.f32 %v70, %v314
  %v316 = vpop.f32.mrb[0].mxu0
  %317 = vmatprep.mubr.bf16.mxu0 0
  %318 = vmatmul.mubr.bf16.gmra.mrb[0].mxu0 %v193
  %v319 = vpop.f32.mrb[0].mxu0
  %v320 = vadd.f32 %v70, %v319
  %v321 = vpop.f32.mrb[0].mxu0
  %v322 = vpop.f32.mrb[0].mxu0
  %v323 = vadd.f32 %v70, %v322
  %v324 = vpop.f32.mrb[0].mxu0
  %325 = vmatprep.mubr.bf16.mxu0 0
  %326 = vmatmul.mubr.bf16.gmra.mrb[0].mxu0 %v196
  %v327 = vpop.f32.mrb[0].mxu0
  %v328 = vadd.f32 %v70, %v327
  %v329 = vpop.f32.mrb[0].mxu0
  %v330 = vpop.f32.mrb[0].mxu0
  %v331 = vadd.f32 %v70, %v330
  %v332 = vpop.f32.mrb[0].mxu0
  %333 = vmatprep.mubr.bf16.mxu0 0
  %334 = vmatmul.mubr.bf16.gmra.mrb[0].mxu0 %v199
  %v335 = vpop.f32.mrb[0].mxu0
  %v336 = vadd.f32 %v70, %v335
  %v337 = vpop.f32.mrb[0].mxu0
  %v338 = vpop.f32.mrb[0].mxu0
  %v339 = vadd.f32 %v70, %v338
  %v340 = vpop.f32.mrb[0].mxu0
  %341 = vmatprep.mubr.bf16.mxu0 0
  %342 = vmatmul.mubr.bf16.gmra.mrb[0].mxu0 %v202
  %v343 = vpop.f32.mrb[0].mxu0
  %v344 = vadd.f32 %v70, %v343
  %v345 = vpop.f32.mrb[0].mxu0
  %v346 = vpop.f32.mrb[0].mxu0
  %v347 = vadd.f32 %v70, %v346
  %v348 = vpop.f32.mrb[0].mxu0
  %349 = vmatprep.mubr.bf16.mxu0 0
  %350 = vmatmul.mubr.bf16.gmra.mrb[0].mxu0 %v205
  %v351 = vpop.f32.mrb[0].mxu0
  %v352 = vadd.f32 %v70, %v351
  %v353 = vpop.f32.mrb[0].mxu0
  %v354 = vpop.f32.mrb[0].mxu0
  %v355 = vadd.f32 %v70, %v354
  %v356 = vpop.f32.mrb[0].mxu0
  %357 = vmatprep.mubr.bf16.mxu0 0
  %358 = vmatmul.mubr.bf16.gmra.mrb[0].mxu0 %v208
  %v359 = vpop.f32.mrb[0].mxu0
  %v360 = vadd.f32 %v70, %v359
  %v361 = vpop.f32.mrb[0].mxu0
  %v362 = vpop.f32.mrb[0].mxu0
  %v363 = vadd.f32 %v70, %v362
  %v364 = vpop.f32.mrb[0].mxu0
  %365 = vmatprep.mubr.bf16.mxu0 0
  %366 = vmatmul.mubr.bf16.gmra.mrb[0].mxu0 %v211
  %v367 = vpop.f32.mrb[0].mxu0
  %v368 = vadd.f32 %v70, %v367
  %v369 = vpop.f32.mrb[0].mxu0
  %v370 = vpop.f32.mrb[0].mxu0
  %v371 = vadd.f32 %v70, %v370
  %v372 = vpop.f32.mrb[0].mxu0
  %373 = vdwg.mxu0
  %v374 = vmax.f32 %v248, 0.0
  %v375 = vmax.f32 %v251, 0.0
  %v376 = vmax.f32 %v256, 0.0
  %v377 = vmax.f32 %v259, 0.0
  %v378 = vmax.f32 %v264, 0.0
  %v379 = vmax.f32 %v267, 0.0
  %v380 = vmax.f32 %v272, 0.0
  %v381 = vmax.f32 %v275, 0.0
  %v382 = vmax.f32 %v280, 0.0
  %v383 = vmax.f32 %v283, 0.0
  %v384 = vmax.f32 %v288, 0.0
  %v385 = vmax.f32 %v291, 0.0
  %v386 = vmax.f32 %v296, 0.0
  %v387 = vmax.f32 %v299, 0.0
  %v388 = vmax.f32 %v304, 0.0
  %v389 = vmax.f32 %v307, 0.0
  %v390 = vmax.f32 %v312, 0.0
  %v391 = vmax.f32 %v315, 0.0
  %v392 = vmax.f32 %v320, 0.0
  %v393 = vmax.f32 %v323, 0.0
  %v394 = vmax.f32 %v328, 0.0
  %v395 = vmax.f32 %v331, 0.0
  %v396 = vmax.f32 %v336, 0.0
  %v397 = vmax.f32 %v339, 0.0
  %v398 = vmax.f32 %v344, 0.0
  %v399 = vmax.f32 %v347, 0.0
  %v400 = vmax.f32 %v352, 0.0
  %v401 = vmax.f32 %v355, 0.0
  %v402 = vmax.f32 %v360, 0.0
  %v403 = vmax.f32 %v363, 0.0
  %v404 = vmax.f32 %v368, 0.0
  %v405 = vmax.f32 %v371, 0.0
  %v406 = vpack.c.bf16 %v375, %v374
  %v407 = vpack.c.bf16 %v377, %v376
  %v408 = vpack.c.bf16 %v379, %v378
  %v409 = vpack.c.bf16 %v381, %v380
  %v410 = vpack.c.bf16 %v383, %v382
  %v411 = vpack.c.bf16 %v385, %v384
  %v412 = vpack.c.bf16 %v387, %v386
  %v413 = vpack.c.bf16 %v389, %v388
  %v414 = vpack.c.bf16 %v391, %v390
  %v415 = vpack.c.bf16 %v393, %v392
  %v416 = vpack.c.bf16 %v395, %v394
  %v417 = vpack.c.bf16 %v397, %v396
  %v418 = vpack.c.bf16 %v399, %v398
  %v419 = vpack.c.bf16 %v401, %v400
  %v420 = vpack.c.bf16 %v403, %v402
  %v421 = vpack.c.bf16 %v405, %v404
  %v422 = vld [vmem:[%s3] sm:$0xf]
  %v423 = vld [vmem:[%s3 + $0x4] sm:$0xf]
  %v424 = vld [vmem:[%s3 + $0x8] sm:$0xf]
  %v425 = vld [vmem:[%s3 + $0xc] sm:$0xf]
  %v426 = vld [vmem:[%s3 + $0x10] sm:$0xf]
  %v427 = vld [vmem:[%s3 + $0x14] sm:$0xf]
  %v428 = vld [vmem:[%s3 + $0x18] sm:$0xf]
  %v429 = vld [vmem:[%s3 + $0x1c] sm:$0xf]
  %v430 = vld [vmem:[%s4] sm:$0x1]
  %v432 = vlaneseq
  %v433 = vshrl.u32 %v432, 7
  %v434 = vsub.s32 0, %v433
  %v435 = vrot.slane %v430, %v434
  %v445 = vunpack.c.l.b16 %v422
  %v446 = vunpack.c.l.b16 %v423
  %v447 = vunpack.c.l.b16 %v424
  %v448 = vunpack.c.l.b16 %v425
  %v449 = vunpack.c.l.b16 %v426
  %v450 = vunpack.c.l.b16 %v427
  %v451 = vunpack.c.l.b16 %v428
  %v452 = vunpack.c.l.b16 %v429
  %v453 = vpack.c.b16 %v446, %v445
  %v454 = vpack.c.b16 %v448, %v447
  %v455 = vpack.c.b16 %v450, %v449
  %v456 = vpack.c.b16 %v452, %v451
  %vm461 = vcmask 523264
  %v463 = vsel %vm461, %v406, 0
  %v466 = vsel %vm461, %v407, 0
  %v469 = vsel %vm461, %v408, 0
  %v472 = vsel %vm461, %v409, 0
  %v475 = vsel %vm461, %v410, 0
  %v478 = vsel %vm461, %v411, 0
  %v481 = vsel %vm461, %v412, 0
  %v484 = vsel %vm461, %v413, 0
  %v487 = vsel %vm461, %v414, 0
  %v490 = vsel %vm461, %v415, 0
  %v493 = vsel %vm461, %v416, 0
  %v496 = vsel %vm461, %v417, 0
  %v499 = vsel %vm461, %v418, 0
  %v502 = vsel %vm461, %v419, 0
  %v505 = vsel %vm461, %v420, 0
  %v508 = vsel %vm461, %v421, 0
  %510 = vmatprep.subr.bf16.mxu0 0
  %511 = vmatpush1.bf16.msra.mxu0 %v453
  %512 = vmatprep.subr.bf16.mxu0 0
  %513 = vmatpush1.bf16.msra.mxu0 %v454
  %514 = vmatprep.subr.bf16.mxu0 0
  %515 = vmatpush1.bf16.msra.mxu0 %v455
  %516 = vmatprep.subr.bf16.mxu0 0
  %517 = vmatpush1.bf16.msra.mxu0 %v456
  %518 = vmatprep.subr.bf16.mxu0 0
  %519 = vmatpush1.bf16.msra.mxu0 0
  %520 = vmatprep.subr.bf16.mxu0 0
  %521 = vmatpush1.bf16.msra.mxu0 0
  %522 = vmatprep.subr.bf16.mxu0 0
  %523 = vmatpush1.bf16.msra.mxu0 0
  %524 = vmatprep.subr.bf16.mxu0 0
  %525 = vmatpush1.bf16.msra.mxu0 0
  %526 = vmatprep.subr.bf16.mxu0 0
  %527 = vmatpush1.bf16.msra.mxu0 0
  %528 = vmatprep.subr.bf16.mxu0 0
  %529 = vmatpush1.bf16.msra.mxu0 0
  %530 = vmatprep.subr.bf16.mxu0 0
  %531 = vmatpush1.bf16.msra.mxu0 0
  %532 = vmatprep.subr.bf16.mxu0 0
  %533 = vmatpush1.bf16.msra.mxu0 0
  %534 = vmatprep.subr.bf16.mxu0 0
  %535 = vmatpush1.bf16.msra.mxu0 0
  %536 = vmatprep.subr.bf16.mxu0 0
  %537 = vmatpush1.bf16.msra.mxu0 0
  %538 = vmatprep.subr.bf16.mxu0 0
  %539 = vmatpush1.bf16.msra.mxu0 0
  %540 = vmatprep.subr.bf16.mxu0 0
  %541 = vmatpush1.bf16.msra.mxu0 0
  %542 = vmatprep.mubr.bf16.mxu0 0
  %543 = vmatmul.mubr.bf16.gmra.mrb[0].mxu0 %v463
  %v544 = vpop.f32.mrb[0].mxu0
  %v545 = vadd.f32 %v435, %v544
  %v546 = vpop.f32.mrb[0].mxu0
  %v547 = vpop.f32.mrb[0].mxu0
  %v548 = vadd.f32 %v435, %v547
  %v549 = vpop.f32.mrb[0].mxu0
  %550 = vmatprep.mubr.bf16.mxu0 0
  %551 = vmatmul.mubr.bf16.gmra.mrb[0].mxu0 %v466
  %v552 = vpop.f32.mrb[0].mxu0
  %v553 = vadd.f32 %v435, %v552
  %v554 = vpop.f32.mrb[0].mxu0
  %v555 = vpop.f32.mrb[0].mxu0
  %v556 = vadd.f32 %v435, %v555
  %v557 = vpop.f32.mrb[0].mxu0
  %558 = vmatprep.mubr.bf16.mxu0 0
  %559 = vmatmul.mubr.bf16.gmra.mrb[0].mxu0 %v469
  %v560 = vpop.f32.mrb[0].mxu0
  %v561 = vadd.f32 %v435, %v560
  %v562 = vpop.f32.mrb[0].mxu0
  %v563 = vpop.f32.mrb[0].mxu0
  %v564 = vadd.f32 %v435, %v563
  %v565 = vpop.f32.mrb[0].mxu0
  %566 = vmatprep.mubr.bf16.mxu0 0
  %567 = vmatmul.mubr.bf16.gmra.mrb[0].mxu0 %v472
  %v568 = vpop.f32.mrb[0].mxu0
  %v569 = vadd.f32 %v435, %v568
  %v570 = vpop.f32.mrb[0].mxu0
  %v571 = vpop.f32.mrb[0].mxu0
  %v572 = vadd.f32 %v435, %v571
  %v573 = vpop.f32.mrb[0].mxu0
  %574 = vmatprep.mubr.bf16.mxu0 0
  %575 = vmatmul.mubr.bf16.gmra.mrb[0].mxu0 %v475
  %v576 = vpop.f32.mrb[0].mxu0
  %v577 = vadd.f32 %v435, %v576
  %v578 = vpop.f32.mrb[0].mxu0
  %v579 = vpop.f32.mrb[0].mxu0
  %v580 = vadd.f32 %v435, %v579
  %v581 = vpop.f32.mrb[0].mxu0
  %582 = vmatprep.mubr.bf16.mxu0 0
  %583 = vmatmul.mubr.bf16.gmra.mrb[0].mxu0 %v478
  %v584 = vpop.f32.mrb[0].mxu0
  %v585 = vadd.f32 %v435, %v584
  %v586 = vpop.f32.mrb[0].mxu0
  %v587 = vpop.f32.mrb[0].mxu0
  %v588 = vadd.f32 %v435, %v587
  %v589 = vpop.f32.mrb[0].mxu0
  %590 = vmatprep.mubr.bf16.mxu0 0
  %591 = vmatmul.mubr.bf16.gmra.mrb[0].mxu0 %v481
  %v592 = vpop.f32.mrb[0].mxu0
  %v593 = vadd.f32 %v435, %v592
  %v594 = vpop.f32.mrb[0].mxu0
  %v595 = vpop.f32.mrb[0].mxu0
  %v596 = vadd.f32 %v435, %v595
  %v597 = vpop.f32.mrb[0].mxu0
  %598 = vmatprep.mubr.bf16.mxu0 0
  %599 = vmatmul.mubr.bf16.gmra.mrb[0].mxu0 %v484
  %v600 = vpop.f32.mrb[0].mxu0
  %v601 = vadd.f32 %v435, %v600
  %v602 = vpop.f32.mrb[0].mxu0
  %v603 = vpop.f32.mrb[0].mxu0
  %v604 = vadd.f32 %v435, %v603
  %v605 = vpop.f32.mrb[0].mxu0
  %606 = vmatprep.mubr.bf16.mxu0 0
  %607 = vmatmul.mubr.bf16.gmra.mrb[0].mxu0 %v487
  %v608 = vpop.f32.mrb[0].mxu0
  %v609 = vadd.f32 %v435, %v608
  %v610 = vpop.f32.mrb[0].mxu0
  %v611 = vpop.f32.mrb[0].mxu0
  %v612 = vadd.f32 %v435, %v611
  %v613 = vpop.f32.mrb[0].mxu0
  %614 = vmatprep.mubr.bf16.mxu0 0
  %615 = vmatmul.mubr.bf16.gmra.mrb[0].mxu0 %v490
  %v616 = vpop.f32.mrb[0].mxu0
  %v617 = vadd.f32 %v435, %v616
  %v618 = vpop.f32.mrb[0].mxu0
  %v619 = vpop.f32.mrb[0].mxu0
  %v620 = vadd.f32 %v435, %v619
  %v621 = vpop.f32.mrb[0].mxu0
  %622 = vmatprep.mubr.bf16.mxu0 0
  %623 = vmatmul.mubr.bf16.gmra.mrb[0].mxu0 %v493
  %v624 = vpop.f32.mrb[0].mxu0
  %v625 = vadd.f32 %v435, %v624
  %v626 = vpop.f32.mrb[0].mxu0
  %v627 = vpop.f32.mrb[0].mxu0
  %v628 = vadd.f32 %v435, %v627
  %v629 = vpop.f32.mrb[0].mxu0
  %630 = vmatprep.mubr.bf16.mxu0 0
  %631 = vmatmul.mubr.bf16.gmra.mrb[0].mxu0 %v496
  %v632 = vpop.f32.mrb[0].mxu0
  %v633 = vadd.f32 %v435, %v632
  %v634 = vpop.f32.mrb[0].mxu0
  %v635 = vpop.f32.mrb[0].mxu0
  %v636 = vadd.f32 %v435, %v635
  %v637 = vpop.f32.mrb[0].mxu0
  %638 = vmatprep.mubr.bf16.mxu0 0
  %639 = vmatmul.mubr.bf16.gmra.mrb[0].mxu0 %v499
  %v640 = vpop.f32.mrb[0].mxu0
  %v641 = vadd.f32 %v435, %v640
  %v642 = vpop.f32.mrb[0].mxu0
  %v643 = vpop.f32.mrb[0].mxu0
  %v644 = vadd.f32 %v435, %v643
  %v645 = vpop.f32.mrb[0].mxu0
  %646 = vmatprep.mubr.bf16.mxu0 0
  %647 = vmatmul.mubr.bf16.gmra.mrb[0].mxu0 %v502
  %v648 = vpop.f32.mrb[0].mxu0
  %v649 = vadd.f32 %v435, %v648
  %v650 = vpop.f32.mrb[0].mxu0
  %v651 = vpop.f32.mrb[0].mxu0
  %v652 = vadd.f32 %v435, %v651
  %v653 = vpop.f32.mrb[0].mxu0
  %654 = vmatprep.mubr.bf16.mxu0 0
  %655 = vmatmul.mubr.bf16.gmra.mrb[0].mxu0 %v505
  %v656 = vpop.f32.mrb[0].mxu0
  %v657 = vadd.f32 %v435, %v656
  %v658 = vpop.f32.mrb[0].mxu0
  %v659 = vpop.f32.mrb[0].mxu0
  %v660 = vadd.f32 %v435, %v659
  %v661 = vpop.f32.mrb[0].mxu0
  %662 = vmatprep.mubr.bf16.mxu0 0
  %663 = vmatmul.mubr.bf16.gmra.mrb[0].mxu0 %v508
  %v664 = vpop.f32.mrb[0].mxu0
  %v665 = vadd.f32 %v435, %v664
  %v666 = vpop.f32.mrb[0].mxu0
  %v667 = vpop.f32.mrb[0].mxu0
  %v668 = vadd.f32 %v435, %v667
  %v669 = vpop.f32.mrb[0].mxu0
  %670 = vdwg.mxu0
  %v671 = vmax.f32 %v545, 0.0
  %v672 = vmax.f32 %v548, 0.0
  %v673 = vmax.f32 %v553, 0.0
  %v674 = vmax.f32 %v556, 0.0
  %v675 = vmax.f32 %v561, 0.0
  %v676 = vmax.f32 %v564, 0.0
  %v677 = vmax.f32 %v569, 0.0
  %v678 = vmax.f32 %v572, 0.0
  %v679 = vmax.f32 %v577, 0.0
  %v680 = vmax.f32 %v580, 0.0
  %v681 = vmax.f32 %v585, 0.0
  %v682 = vmax.f32 %v588, 0.0
  %v683 = vmax.f32 %v593, 0.0
  %v684 = vmax.f32 %v596, 0.0
  %v685 = vmax.f32 %v601, 0.0
  %v686 = vmax.f32 %v604, 0.0
  %v687 = vmax.f32 %v609, 0.0
  %v688 = vmax.f32 %v612, 0.0
  %v689 = vmax.f32 %v617, 0.0
  %v690 = vmax.f32 %v620, 0.0
  %v691 = vmax.f32 %v625, 0.0
  %v692 = vmax.f32 %v628, 0.0
  %v693 = vmax.f32 %v633, 0.0
  %v694 = vmax.f32 %v636, 0.0
  %v695 = vmax.f32 %v641, 0.0
  %v696 = vmax.f32 %v644, 0.0
  %v697 = vmax.f32 %v649, 0.0
  %v698 = vmax.f32 %v652, 0.0
  %v699 = vmax.f32 %v657, 0.0
  %v700 = vmax.f32 %v660, 0.0
  %v701 = vmax.f32 %v665, 0.0
  %v702 = vmax.f32 %v668, 0.0
  %v703 = vld [vmem:[%s5] sm:$0x1]
  %v705 = vlaneseq
  %v706 = vshrl.u32 %v705, 7
  %v707 = vsub.s32 0, %v706
  %v708 = vrot.slane %v703, %v707
  %v710 = vmul.f32 %v671, %v708
  %v711 = vmul.f32 %v672, %v708
  %v712 = vmul.f32 %v673, %v708
  %v713 = vmul.f32 %v674, %v708
  %v714 = vmul.f32 %v675, %v708
  %v715 = vmul.f32 %v676, %v708
  %v716 = vmul.f32 %v677, %v708
  %v717 = vmul.f32 %v678, %v708
  %v718 = vmul.f32 %v679, %v708
  %v719 = vmul.f32 %v680, %v708
  %v720 = vmul.f32 %v681, %v708
  %v721 = vmul.f32 %v682, %v708
  %v722 = vmul.f32 %v683, %v708
  %v723 = vmul.f32 %v684, %v708
  %v724 = vmul.f32 %v685, %v708
  %v725 = vmul.f32 %v686, %v708
  %v726 = vmul.f32 %v687, %v708
  %v727 = vmul.f32 %v688, %v708
  %v728 = vmul.f32 %v689, %v708
  %v729 = vmul.f32 %v690, %v708
  %v730 = vmul.f32 %v691, %v708
  %v731 = vmul.f32 %v692, %v708
  %v732 = vmul.f32 %v693, %v708
  %v733 = vmul.f32 %v694, %v708
  %v734 = vmul.f32 %v695, %v708
  %v735 = vmul.f32 %v696, %v708
  %v736 = vmul.f32 %v697, %v708
  %v737 = vmul.f32 %v698, %v708
  %v738 = vmul.f32 %v699, %v708
  %v739 = vmul.f32 %v700, %v708
  %v740 = vmul.f32 %v701, %v708
  %v741 = vmul.f32 %v702, %v708
  %742 = vxpose.xlu0.b32.start [1/16] %v710, 128
  %743 = vxpose.xlu0.b32.cont [2/16] %v711, 128
  %744 = vxpose.xlu0.b32.cont [3/16] %v712, 128
  %745 = vxpose.xlu0.b32.cont [4/16] %v713, 128
  %746 = vxpose.xlu0.b32.cont [5/16] %v714, 128
  %747 = vxpose.xlu0.b32.cont [6/16] %v715, 128
  %748 = vxpose.xlu0.b32.cont [7/16] %v716, 128
  %749 = vxpose.xlu0.b32.cont [8/16] %v717, 128
  %750 = vxpose.xlu0.b32.cont [9/16] %v718, 128
  %751 = vxpose.xlu0.b32.cont [10/16] %v719, 128
  %752 = vxpose.xlu0.b32.cont [11/16] %v720, 128
  %753 = vxpose.xlu0.b32.cont [12/16] %v721, 128
  %754 = vxpose.xlu0.b32.cont [13/16] %v722, 128
  %755 = vxpose.xlu0.b32.cont [14/16] %v723, 128
  %756 = vxpose.xlu0.b32.cont [15/16] %v724, 128
  %757 = vxpose.xlu0.b32.end [16/16] %v725, 128
  %v758 = vpop.trf.xlu0
  %v759 = vpop.trf.xlu0
  %v760 = vpop.trf.xlu0
  %v761 = vpop.trf.xlu0
  %v762 = vpop.trf.xlu0
  %v763 = vpop.trf.xlu0
  %v764 = vpop.trf.xlu0
  %v765 = vpop.trf.xlu0
  %v766 = vpop.trf.xlu0
  %v767 = vpop.trf.xlu0
  %v768 = vpop.trf.xlu0
  %v769 = vpop.trf.xlu0
  %v770 = vpop.trf.xlu0
  %v771 = vpop.trf.xlu0
  %v772 = vpop.trf.xlu0
  %v773 = vpop.trf.xlu0
  %774 = vxpose.xlu0.b32.start [1/16] %v726, 128
  %775 = vxpose.xlu0.b32.cont [2/16] %v727, 128
  %776 = vxpose.xlu0.b32.cont [3/16] %v728, 128
  %777 = vxpose.xlu0.b32.cont [4/16] %v729, 128
  %778 = vxpose.xlu0.b32.cont [5/16] %v730, 128
  %779 = vxpose.xlu0.b32.cont [6/16] %v731, 128
  %780 = vxpose.xlu0.b32.cont [7/16] %v732, 128
  %781 = vxpose.xlu0.b32.cont [8/16] %v733, 128
  %782 = vxpose.xlu0.b32.cont [9/16] %v734, 128
  %783 = vxpose.xlu0.b32.cont [10/16] %v735, 128
  %784 = vxpose.xlu0.b32.cont [11/16] %v736, 128
  %785 = vxpose.xlu0.b32.cont [12/16] %v737, 128
  %786 = vxpose.xlu0.b32.cont [13/16] %v738, 128
  %787 = vxpose.xlu0.b32.cont [14/16] %v739, 128
  %788 = vxpose.xlu0.b32.cont [15/16] %v740, 128
  %789 = vxpose.xlu0.b32.end [16/16] %v741, 128
  %v790 = vpop.trf.xlu0
  %v791 = vpop.trf.xlu0
  %v792 = vpop.trf.xlu0
  %v793 = vpop.trf.xlu0
  %v794 = vpop.trf.xlu0
  %v795 = vpop.trf.xlu0
  %v796 = vpop.trf.xlu0
  %v797 = vpop.trf.xlu0
  %v798 = vpop.trf.xlu0
  %v799 = vpop.trf.xlu0
  %v800 = vpop.trf.xlu0
  %v801 = vpop.trf.xlu0
  %v802 = vpop.trf.xlu0
  %v803 = vpop.trf.xlu0
  %v804 = vpop.trf.xlu0
  %v805 = vpop.trf.xlu0
  %v806 = vadd.f32 %v758, %v759
  %v807 = vadd.f32 %v806, %v760
  %v808 = vadd.f32 %v807, %v761
  %v809 = vadd.f32 %v808, %v762
  %v810 = vadd.f32 %v809, %v763
  %v811 = vadd.f32 %v810, %v764
  %v812 = vadd.f32 %v811, %v765
  %v813 = vadd.f32 %v812, %v766
  %v814 = vadd.f32 %v813, %v767
  %v815 = vadd.f32 %v814, %v768
  %v816 = vadd.f32 %v815, %v769
  %v817 = vadd.f32 %v816, %v770
  %v818 = vadd.f32 %v817, %v771
  %v819 = vadd.f32 %v818, %v772
  %v820 = vadd.f32 %v819, %v773
  %v821 = vrot.slane %v820, 4
  %v822 = vadd.f32 %v820, %v821
  %v823 = vrot.slane %v822, 2
  %v824 = vadd.f32 %v822, %v823
  %v825 = vrot.slane %v824, 1
  %v826 = vadd.f32 %v824, %v825
  %v827 = vadd.f32 %v790, %v791
  %v828 = vadd.f32 %v827, %v792
  %v829 = vadd.f32 %v828, %v793
  %v830 = vadd.f32 %v829, %v794
  %v831 = vadd.f32 %v830, %v795
  %v832 = vadd.f32 %v831, %v796
  %v833 = vadd.f32 %v832, %v797
  %v834 = vadd.f32 %v833, %v798
  %v835 = vadd.f32 %v834, %v799
  %v836 = vadd.f32 %v835, %v800
  %v837 = vadd.f32 %v836, %v801
  %v838 = vadd.f32 %v837, %v802
  %v839 = vadd.f32 %v838, %v803
  %v840 = vadd.f32 %v839, %v804
  %v841 = vadd.f32 %v840, %v805
  %v842 = vrot.slane %v841, 4
  %v843 = vadd.f32 %v841, %v842
  %v844 = vrot.slane %v843, 2
  %v845 = vadd.f32 %v843, %v844
  %v846 = vrot.slane %v845, 1
  %v847 = vadd.f32 %v845, %v846
  %v848 = vld [vmem:[#allocation2] sm:$0x1]
  %850 = vset.pattern.permute.xlu0 0
  %851 = vperm.xlu0 %850, %v848
  %v852 = vpop.permute.xlu0 %851
  %v854 = vlaneseq
  %v855 = vshrl.u32 %v854, 7
  %v856 = vsub.s32 0, %v855
  %v857 = vrot.slane %v852, %v856
  %v858 = vadd.f32 %v826, %v857
  %v859 = vadd.f32 %v847, %v857
  %v860 = vsub.f32 0.0, %v858
  %v861 = vsub.f32 0.0, %v859
  %v862 = vmul.f32 %v860, 1.442695
  %v863 = vpow.pop %v862
  %v864 = vmul.f32 %v861, 1.442695
  %v865 = vpow.pop %v864
  %v866 = vadd.f32 %v863, 1.0
  %v867 = vadd.f32 %v865, 1.0
  %v868 = vrcp.pop %v866
  %v869 = vrcp.pop %v867
  %v872 = vcombine.low %v868, %v869
  %v874 = vunpack.c.l.s4 1966171168
  %v875 = vunpack.c.0.s8 %v874
  %v876 = vlaneseq
  %v877 = vshrl.u32 %v876, 7
  %v878 = vsub.s32 %v875, %v877
  %v879 = vrot.slane %v872, %v878
  %v881 = vunpack.c.l.s4 1966171168
  %v882 = vunpack.c.0.s8 %v881
  %v883 = vlaneseq
  %v884 = vshrl.u32 %v883, 7
  %v885 = vsub.s32 %v882, %v884
  %v886 = vrot.slane %v879, %v885
  %v888 = vlaneseq
  %vm889 = vcmp.ge.s32.totalorder %v888, 0
  %vm890 = vcmp.lt.s32.totalorder %v888, 256
  %vm891 = vmand %vm889, %vm890
  %892 = vst.msk [vmem:[%s7] sm:$0x3] %vm891, %v886
  // Predicated region
  $region30: #{fraud_nn_forward.1} parent=0 // pred_check
    _
  $region31: #{fraud_nn_forward.1} parent=0 // pred_check_branch
    %894 = sbr.rel (0) target = $region33
  $region32: #{fraud_nn_forward.1} parent=0 // pred_region
    _
  $region33: #{fraud_nn_forward.1} parent=0 // pred_fallthru
    _
  // Predicated region
  $region34: #{fraud_nn_forward.1} parent=0 // pred_check
    _
  $region35: #{fraud_nn_forward.1} parent=0 // pred_check_branch
    %896 = sbr.rel (0) target = $region37
  $region36: #{fraud_nn_forward.1} parent=0 // pred_region
    _
  $region37: #{fraud_nn_forward.1} parent=0 // pred_fallthru
    _

</llo_original>
